<compile_context>
chip_gen: v6e
topology: v6e:2x2x1
jax: 0.10.0
libtpu: 0.0.40
codegen_flags: <defaults>
</compile_context>

<pallas_src>
import math

import jax
import jax.numpy as jnp
from jax.experimental import pallas as pl
from jax.experimental.pallas import tpu as pltpu

HIDDEN = 128
LANES = 128


def _round_up(n, m):
    return ((n + m - 1) // m) * m


# --------------------------------------------------------------- kernels ----
def _trunk(x_ref, w1_ref, b1_ref, w2_ref, b2_ref):
    """fc1 -> relu -> fc2 -> relu  (== PolicyNetwork.forward).

    bf16 MXU operands, f32 accumulation, f32 bias/relu.
    """
    x = x_ref[...].astype(jnp.bfloat16)
    h1 = jnp.dot(x, w1_ref[...], preferred_element_type=jnp.float32) + b1_ref[...]
    h1 = jnp.maximum(h1, 0.0)
    h2 = (jnp.dot(h1.astype(jnp.bfloat16), w2_ref[...],
                  preferred_element_type=jnp.float32) + b2_ref[...])
    return jnp.maximum(h2, 0.0)


def _heads(h2, wh_ref, bh_ref):
    # Fused (policy | value | zero-pad) head matmul -> lane-dense 128 columns.
    return (jnp.dot(h2.astype(jnp.bfloat16), wh_ref[...],
                    preferred_element_type=jnp.float32) + bh_ref[...])


def _kernel_with_hidden(x_ref, w1_ref, b1_ref, w2_ref, b2_ref, wh_ref, bh_ref,
                        h_ref, heads_ref):
    h2 = _trunk(x_ref, w1_ref, b1_ref, w2_ref, b2_ref)
    h_ref[...] = h2.astype(h_ref.dtype)
    heads_ref[...] = _heads(h2, wh_ref, bh_ref).astype(heads_ref.dtype)


def _kernel_heads_only(x_ref, w1_ref, b1_ref, w2_ref, b2_ref, wh_ref, bh_ref,
                       heads_ref):
    h2 = _trunk(x_ref, w1_ref, b1_ref, w2_ref, b2_ref)
    heads_ref[...] = _heads(h2, wh_ref, bh_ref).astype(heads_ref.dtype)


# -------------------------------------------------------------- wrappers ----
def prepare_params(raw):
    """One-time parameter prep (call this OUTSIDE the per-step hot path).

    * w1/w2 cast to bf16 for the MXU (biases stay f32),
    * policy_head / value_head fused into a single head matrix and zero-padded
      to a lane-dense 128 output columns, then cast to bf16.
    """
    act_dim = raw["wp"].shape[1]
    head_dim = act_dim + 1
    head_pad = _round_up(head_dim, LANES)

    wh = jnp.concatenate([raw["wp"], raw["wv"]], axis=1)
    bh = jnp.concatenate([raw["bp"], raw["bv"]], axis=1)
    wh = jnp.pad(wh, ((0, 0), (0, head_pad - head_dim)))
    bh = jnp.pad(bh, ((0, 0), (0, head_pad - head_dim)))

    return dict(
        w1=raw["w1"].astype(jnp.bfloat16), b1=raw["b1"].astype(jnp.float32),
        w2=raw["w2"].astype(jnp.bfloat16), b2=raw["b2"].astype(jnp.float32),
        wh=wh.astype(jnp.bfloat16), bh=bh.astype(jnp.float32),
        act_dim=act_dim, head_pad=head_pad)


def policy_network_forward(x, kp, *, return_hidden=True,
                           hidden_dtype=jnp.bfloat16,
                           heads_dtype=jnp.float32,
                           max_tile_b=1024, min_grid_steps=4):
    """Runs the Pallas kernel on prepared params `kp` (see prepare_params).

    Returns (hidden, logits, value) if return_hidden else (None, logits, value).
      hidden : (B, 128)      -- PolicyNetwork.forward(x)   (hidden_dtype)
      logits : (B, act_dim)  -- policy_head(forward(x))
      value  : (B, 1)        -- value_head(forward(x))
    """
    B, obs_dim = x.shape
    act_dim = kp["act_dim"]
    head_pad = kp["head_pad"]

    # Batch tiling: multiple of 8 sublanes; split large batches into at least
    # `min_grid_steps` grid steps so the "parallel" axis can shard across
    # v7x's two TensorCores; cap the tile so the double-buffered working set
    # stays tiny vs. VMEM on every generation.
    tile_b = _round_up(pl.cdiv(B, min_grid_steps), 8)
    tile_b = max(8, min(max_tile_b, tile_b))
    b_pad = _round_up(B, tile_b)
    if b_pad != B:
        x = jnp.pad(x, ((0, b_pad - B), (0, 0)))
    grid = (b_pad // tile_b,)

    # VMEM budget: 2x double-buffered per-row tiles + resident weights.
    per_row = obs_dim * jnp.dtype(x.dtype).itemsize \
        + head_pad * jnp.dtype(heads_dtype).itemsize
    if return_hidden:
        per_row += HIDDEN * jnp.dtype(hidden_dtype).itemsize
    weights_bytes = 2 * (obs_dim * HIDDEN + HIDDEN * HIDDEN + HIDDEN * head_pad) \
        + 4 * (2 * HIDDEN + head_pad)
    vmem_needed = 2 * tile_b * per_row + 2 * weights_bytes + (2 << 20)
    compiler_kwargs = dict(dimension_semantics=("parallel",))
    if vmem_needed > (16 << 20):  # v5e's default scoped-VMEM limit is 16 MiB
        compiler_kwargs["vmem_limit_bytes"] = int(min(vmem_needed, 100 << 20))
    compiler_params = pltpu.CompilerParams(**compiler_kwargs)

    # x is tiled over the batch; weights/biases use constant index maps so
    # their blocks stay resident in VMEM across grid steps.
    x_spec = pl.BlockSpec((tile_b, obs_dim), lambda i: (i, 0))
    w1_spec = pl.BlockSpec((obs_dim, HIDDEN), lambda i: (0, 0))
    b1_spec = pl.BlockSpec((1, HIDDEN), lambda i: (0, 0))
    w2_spec = pl.BlockSpec((HIDDEN, HIDDEN), lambda i: (0, 0))
    b2_spec = pl.BlockSpec((1, HIDDEN), lambda i: (0, 0))
    wh_spec = pl.BlockSpec((HIDDEN, head_pad), lambda i: (0, 0))
    bh_spec = pl.BlockSpec((1, head_pad), lambda i: (0, 0))
    in_specs = [x_spec, w1_spec, b1_spec, w2_spec, b2_spec, wh_spec, bh_spec]

    heads_spec = pl.BlockSpec((tile_b, head_pad), lambda i: (i, 0))
    heads_shape = jax.ShapeDtypeStruct((b_pad, head_pad), heads_dtype)

    args = (x, kp["w1"], kp["b1"], kp["w2"], kp["b2"], kp["wh"], kp["bh"])

    if return_hidden:
        hidden, heads = pl.pallas_call(
            _kernel_with_hidden,
            grid=grid,
            out_shape=(jax.ShapeDtypeStruct((b_pad, HIDDEN), hidden_dtype),
                       heads_shape),
            in_specs=in_specs,
            out_specs=(pl.BlockSpec((tile_b, HIDDEN), lambda i: (i, 0)),
                       heads_spec),
            compiler_params=compiler_params,
        )(*args)
        hidden = hidden[:B]
    else:
        heads = pl.pallas_call(
            _kernel_heads_only,
            grid=grid,
            out_shape=heads_shape,
            in_specs=in_specs,
            out_specs=heads_spec,
            compiler_params=compiler_params,
        )(*args)
        hidden = None

    heads = heads[:B]
    logits = heads[:, :act_dim]
    value = heads[:, act_dim:act_dim + 1]
    return hidden, logits, value


# ----------------------------------------------------------------- params ----
def init_params(key, obs_dim, act_dim):
    """Deterministic init mimicking PyTorch nn.Linear default U(-1/sqrt(in), 1/sqrt(in))."""
    def linear(k, fan_in, fan_out):
        kw, kb = jax.random.split(k)
        bound = 1.0 / math.sqrt(fan_in)
        w = jax.random.uniform(kw, (fan_in, fan_out), jnp.float32, -bound, bound)
        b = jax.random.uniform(kb, (1, fan_out), jnp.float32, -bound, bound)
        return w, b

    k1, k2, k3, k4 = jax.random.split(key, 4)
    w1, b1 = linear(k1, obs_dim, HIDDEN)
    w2, b2 = linear(k2, HIDDEN, HIDDEN)
    wp, bp = linear(k3, HIDDEN, act_dim)
    wv, bv = linear(k4, HIDDEN, 1)
    return dict(w1=w1, b1=b1, w2=w2, b2=b2, wp=wp, bp=bp, wv=wv, bv=bv)


# ------------------------------------------------------------- references ----
def _reference_f32(x, p):
    h = jnp.maximum(x @ p["w1"] + p["b1"], 0.0)
    h = jnp.maximum(h @ p["w2"] + p["b2"], 0.0)
    return h, h @ p["wp"] + p["bp"], h @ p["wv"] + p["bv"]


def _reference_bf16(x, p):
    """Mirrors the kernel's math exactly: bf16 MXU operands, f32 accumulate."""
    bf = jnp.bfloat16
    h = jnp.maximum(jnp.dot(x.astype(bf), p["w1"].astype(bf),
                            preferred_element_type=jnp.float32) + p["b1"], 0.0)
    h = jnp.maximum(jnp.dot(h.astype(bf), p["w2"].astype(bf),
                            preferred_element_type=jnp.float32) + p["b2"], 0.0)
    logits = jnp.dot(h.astype(bf), p["wp"].astype(bf),
                     preferred_element_type=jnp.float32) + p["bp"]
    value = jnp.dot(h.astype(bf), p["wv"].astype(bf),
                    preferred_element_type=jnp.float32) + p["bv"]
    return h, logits, value


if __name__ == "__main__":
    obs_dim, act_dim, batch = 16, 4, 2

    key = jax.random.PRNGKey(0)
    kx, kparams, kx2 = jax.random.split(key, 3)
    x = jax.random.normal(kx, (batch, obs_dim), dtype=jnp.float32)
    raw = init_params(kparams, obs_dim, act_dim)
    params = prepare_params(raw)  # one-time: bf16 weights, fused + padded heads

    # Bit-accurate (vs kernel math) and f32 sanity references.
    hq, lq, vq = _reference_bf16(x, raw)
    hf, lf, vf = _reference_f32(x, raw)

    # 1) Full forward (hidden + both heads), single-tile grid.
    hidden, logits, value = policy_network_forward(x, params)
    jax.block_until_ready((hidden, logits, value))
    assert jnp.allclose(logits, lq, atol=1e-3), "logits mismatch (bf16 ref)"
    assert jnp.allclose(value, vq, atol=1e-3), "value mismatch (bf16 ref)"
    assert jnp.allclose(hidden.astype(jnp.float32), hq, atol=2e-2), "hidden mismatch"
    assert jnp.allclose(logits, lf, atol=1e-1), "logits drift vs f32 ref"
    assert jnp.allclose(value, vf, atol=1e-1), "value drift vs f32 ref"

    # 2) act()/value() style path: hidden writeback dropped, just logits + value.
    _, logits2, value2 = policy_network_forward(x, params, return_hidden=False)
    jax.block_until_ready((logits2, value2))
    assert jnp.allclose(logits2, lq, atol=1e-3), "heads-only logits mismatch"
    assert jnp.allclose(value2, vq, atol=1e-3), "heads-only value mismatch"

    # 3) Multi-tile grid (batch padded & split across grid steps).
    xb = jax.random.normal(kx2, (50, obs_dim), dtype=jnp.float32)
    hb, lb, vb = policy_network_forward(xb, params, max_tile_b=16)
    jax.block_until_ready((hb, lb, vb))
    hbq, lbq, vbq = _reference_bf16(xb, raw)
    assert jnp.allclose(lb, lbq, atol=1e-3), "tiled logits mismatch"
    assert jnp.allclose(vb, vbq, atol=1e-3), "tiled value mismatch"
    assert jnp.allclose(hb.astype(jnp.float32), hbq, atol=2e-2), "tiled hidden mismatch"

    # act()/dist()-style sampling glue (host-side, not the kernel's job)
    # TODO(synk): Categorical sampling / .item() has no Pallas equivalent; done in plain JAX.
    action = jax.random.categorical(jax.random.PRNGKey(1), logits, axis=-1)
    log_probs = jax.nn.log_softmax(logits, axis=-1)
    _ = jnp.take_along_axis(log_probs, action[:, None], axis=-1)

    print("KERNEL_OK")
</pallas_src>

<mosaic_0001>
module attributes {stable_mosaic.version = 11 : i64} {
  func.func @_kernel_with_hidden(%arg0: i32, %arg1: memref<8x16xf32, #tpu.memory_space<vmem>>, %arg2: memref<16x128xbf16, #tpu.memory_space<vmem>>, %arg3: memref<1x128xf32, #tpu.memory_space<vmem>>, %arg4: memref<128x128xbf16, #tpu.memory_space<vmem>>, %arg5: memref<1x128xf32, #tpu.memory_space<vmem>>, %arg6: memref<128x128xbf16, #tpu.memory_space<vmem>>, %arg7: memref<1x128xf32, #tpu.memory_space<vmem>>, %arg8: memref<8x128xbf16, #tpu.memory_space<vmem>>, %arg9: memref<8x128xf32, #tpu.memory_space<vmem>>) attributes {dimension_semantics = [#tpu.dimension_semantics<parallel>], iteration_bounds = array<i64: 1>, scalar_prefetch = 0 : i64, scratch_operands = 0 : i64, tpu.core_type = #tpu.core_type<tc>, window_params = [{transform_indices = @transform_0, window_bounds = array<i64: 8, 16>}, {pipeline_mode = #tpu.pipeline_mode<synchronous>, transform_indices = @transform_1, window_bounds = array<i64: 16, 128>}, {pipeline_mode = #tpu.pipeline_mode<synchronous>, transform_indices = @transform_2, window_bounds = array<i64: 1, 128>}, {pipeline_mode = #tpu.pipeline_mode<synchronous>, transform_indices = @transform_3, window_bounds = array<i64: 128, 128>}, {pipeline_mode = #tpu.pipeline_mode<synchronous>, transform_indices = @transform_4, window_bounds = array<i64: 1, 128>}, {pipeline_mode = #tpu.pipeline_mode<synchronous>, transform_indices = @transform_5, window_bounds = array<i64: 128, 128>}, {pipeline_mode = #tpu.pipeline_mode<synchronous>, transform_indices = @transform_6, window_bounds = array<i64: 1, 128>}, {transform_indices = @transform_7, window_bounds = array<i64: 8, 128>}, {transform_indices = @transform_8, window_bounds = array<i64: 8, 128>}]} {
    %c0 = arith.constant 0 : index
    %c0_0 = arith.constant 0 : index
    %0 = vector.load %arg1[%c0, %c0_0] : memref<8x16xf32, #tpu.memory_space<vmem>>, vector<8x16xf32>
    %1 = arith.truncf %0 : vector<8x16xf32> to vector<8x16xbf16>
    %c0_1 = arith.constant 0 : index
    %c0_2 = arith.constant 0 : index
    %2 = vector.load %arg2[%c0_1, %c0_2] : memref<16x128xbf16, #tpu.memory_space<vmem>>, vector<16x128xbf16>
    %cst = arith.constant dense<0.000000e+00> : vector<8x128xf32>
    %3 = tpu.matmul %1, %2, %cst {dimension_numbers = #tpu.dot_dimension_numbers<[1], [0], [0], [1], [0, 0, 1, 1], [], []>} : vector<8x16xbf16>, vector<16x128xbf16>, vector<8x128xf32> -> vector<8x128xf32>
    %c0_3 = arith.constant 0 : index
    %c0_4 = arith.constant 0 : index
    %4 = vector.load %arg3[%c0_3, %c0_4] : memref<1x128xf32, #tpu.memory_space<vmem>>, vector<1x128xf32>
    %5 = vector.broadcast %4 : vector<1x128xf32> to vector<8x128xf32>
    %6 = arith.addf %3, %5 : vector<8x128xf32>
    %cst_5 = arith.constant 0.000000e+00 : f32
    %7 = vector.broadcast %cst_5 : f32 to vector<8x128xf32>
    %8 = arith.maximumf %6, %7 : vector<8x128xf32>
    %9 = arith.truncf %8 : vector<8x128xf32> to vector<8x128xbf16>
    %c0_6 = arith.constant 0 : index
    %c0_7 = arith.constant 0 : index
    %10 = vector.load %arg4[%c0_6, %c0_7] : memref<128x128xbf16, #tpu.memory_space<vmem>>, vector<128x128xbf16>
    %cst_8 = arith.constant dense<0.000000e+00> : vector<8x128xf32>
    %11 = tpu.matmul %9, %10, %cst_8 {dimension_numbers = #tpu.dot_dimension_numbers<[1], [0], [0], [1], [0, 0, 1, 1], [], []>} : vector<8x128xbf16>, vector<128x128xbf16>, vector<8x128xf32> -> vector<8x128xf32>
    %c0_9 = arith.constant 0 : index
    %c0_10 = arith.constant 0 : index
    %12 = vector.load %arg5[%c0_9, %c0_10] : memref<1x128xf32, #tpu.memory_space<vmem>>, vector<1x128xf32>
    %13 = vector.broadcast %12 : vector<1x128xf32> to vector<8x128xf32>
    %14 = arith.addf %11, %13 : vector<8x128xf32>
    %cst_11 = arith.constant 0.000000e+00 : f32
    %15 = vector.broadcast %cst_11 : f32 to vector<8x128xf32>
    %16 = arith.maximumf %14, %15 : vector<8x128xf32>
    %17 = arith.truncf %16 : vector<8x128xf32> to vector<8x128xbf16>
    %c0_12 = arith.constant 0 : index
    %c0_13 = arith.constant 0 : index
    %18 = vector.load %arg8[%c0_12, %c0_13] : memref<8x128xbf16, #tpu.memory_space<vmem>>, vector<8x128xbf16>
    tpu.vector_store %arg8[%c0_12, %c0_13], %17 {strides = array<i32>} : memref<8x128xbf16, #tpu.memory_space<vmem>>, vector<8x128xbf16>,
    %19 = arith.truncf %16 : vector<8x128xf32> to vector<8x128xbf16>
    %c0_14 = arith.constant 0 : index
    %c0_15 = arith.constant 0 : index
    %20 = vector.load %arg6[%c0_14, %c0_15] : memref<128x128xbf16, #tpu.memory_space<vmem>>, vector<128x128xbf16>
    %cst_16 = arith.constant dense<0.000000e+00> : vector<8x128xf32>
    %21 = tpu.matmul %19, %20, %cst_16 {dimension_numbers = #tpu.dot_dimension_numbers<[1], [0], [0], [1], [0, 0, 1, 1], [], []>} : vector<8x128xbf16>, vector<128x128xbf16>, vector<8x128xf32> -> vector<8x128xf32>
    %c0_17 = arith.constant 0 : index
    %c0_18 = arith.constant 0 : index
    %22 = vector.load %arg7[%c0_17, %c0_18] : memref<1x128xf32, #tpu.memory_space<vmem>>, vector<1x128xf32>
    %23 = vector.broadcast %22 : vector<1x128xf32> to vector<8x128xf32>
    %24 = arith.addf %21, %23 : vector<8x128xf32>
    %c0_19 = arith.constant 0 : index
    %c0_20 = arith.constant 0 : index
    %25 = vector.load %arg9[%c0_19, %c0_20] : memref<8x128xf32, #tpu.memory_space<vmem>>, vector<8x128xf32>
    tpu.vector_store %arg9[%c0_19, %c0_20], %24 {strides = array<i32>} : memref<8x128xf32, #tpu.memory_space<vmem>>, vector<8x128xf32>,
    return
  }
  func.func @transform_0(%arg0: i32) -> (i32, i32) {
    %c0_i32 = arith.constant 0 : i32
    %c0_i32_0 = arith.constant 0 : i32
    return %arg0, %c0_i32 : i32, i32
  }
  func.func @transform_1(%arg0: i32) -> (i32, i32) {
    %c0_i32 = arith.constant 0 : i32
    %c0_i32_0 = arith.constant 0 : i32
    %c0_i32_1 = arith.constant 0 : i32
    return %c0_i32, %c0_i32_0 : i32, i32
  }
  func.func @transform_2(%arg0: i32) -> (i32, i32) {
    %c0_i32 = arith.constant 0 : i32
    %c0_i32_0 = arith.constant 0 : i32
    %c0_i32_1 = arith.constant 0 : i32
    return %c0_i32, %c0_i32_0 : i32, i32
  }
  func.func @transform_3(%arg0: i32) -> (i32, i32) {
    %c0_i32 = arith.constant 0 : i32
    %c0_i32_0 = arith.constant 0 : i32
    %c0_i32_1 = arith.constant 0 : i32
    return %c0_i32, %c0_i32_0 : i32, i32
  }
  func.func @transform_4(%arg0: i32) -> (i32, i32) {
    %c0_i32 = arith.constant 0 : i32
    %c0_i32_0 = arith.constant 0 : i32
    %c0_i32_1 = arith.constant 0 : i32
    return %c0_i32, %c0_i32_0 : i32, i32
  }
  func.func @transform_5(%arg0: i32) -> (i32, i32) {
    %c0_i32 = arith.constant 0 : i32
    %c0_i32_0 = arith.constant 0 : i32
    %c0_i32_1 = arith.constant 0 : i32
    return %c0_i32, %c0_i32_0 : i32, i32
  }
  func.func @transform_6(%arg0: i32) -> (i32, i32) {
    %c0_i32 = arith.constant 0 : i32
    %c0_i32_0 = arith.constant 0 : i32
    %c0_i32_1 = arith.constant 0 : i32
    return %c0_i32, %c0_i32_0 : i32, i32
  }
  func.func @transform_7(%arg0: i32) -> (i32, i32) {
    %c0_i32 = arith.constant 0 : i32
    %c0_i32_0 = arith.constant 0 : i32
    return %arg0, %c0_i32 : i32, i32
  }
  func.func @transform_8(%arg0: i32) -> (i32, i32) {
    %c0_i32 = arith.constant 0 : i32
    %c0_i32_0 = arith.constant 0 : i32
    return %arg0, %c0_i32 : i32, i32
  }
}

</mosaic_0001>

<llo_original>
// kernel: tpu_custom_call.1
$region0: #{tpu_custom_call.1}
  #allocation0 [shape = 'u32[]', space=smem, size = 0x4, offset = 0x4, fixed_abs, tag = 'smem constant byte address 0x4 - core index']
  #allocation1 [shape = 'u32[144,128]{1,0:T(1,128)}', space=vmem, size = 0x12000, scoped, tag = 'internal scratch']
  %s0 = inlined_call_operand.hbm [shape: f32[8,16], index: 0, kind: input, shape index: {}]
  %s1 = inlined_call_operand.hbm [shape: bf16[16,128], index: 1, kind: input, shape index: {}]
  %s2 = inlined_call_operand.vmem [shape: f32[1,128], index: 2, kind: input, shape index: {}]
  %s3 = inlined_call_operand.hbm [shape: bf16[128,128], index: 3, kind: input, shape index: {}]
  %s4 = inlined_call_operand.vmem [shape: f32[1,128], index: 4, kind: input, shape index: {}]
  %s5 = inlined_call_operand.hbm [shape: bf16[128,128], index: 5, kind: input, shape index: {}]
  %s6 = inlined_call_operand.vmem [shape: f32[1,128], index: 6, kind: input, shape index: {}]
  %s7 = inlined_call_operand.hbm [shape: bf16[8,128], index: 7, kind: output, shape index: {0}]
  %s8 = inlined_call_operand.hbm [shape: f32[8,128], index: 8, kind: output, shape index: {1}]
  %9 = xla_tuple %s7, %s8
  %s10 = sld [smem:[#allocation0]]
  $region62: #{tpu_custom_call.1} parent=0
    _
  %s12 = ssub.s32 1, %s10
  %s13 = scalar_select 0, %s12, %s10
  $region1: #{tpu_custom_call.1} parent=0
    #allocation2 [shape = 'u8[4096]{0}', space=vmem, size = 0x1000, scoped, tag = 'input window, operand 0, single buffered']
    #allocation3 [shape = 's32[1]{0}', space=sflag, size = 0x4, scoped, tag = 'scoped memory for tpu_custom_call.1']
    #allocation4 [shape = 's32[1]{0}', space=sflag, size = 0x4, scoped, tag = 'scoped memory for tpu_custom_call.1']
    #allocation5 [shape = 'u8[4096]{0}', space=vmem, size = 0x1000, scoped, tag = 'input window, operand 1, single buffered']
    #allocation6 [shape = 's32[1]{0}', space=sflag, size = 0x4, scoped, tag = 'scoped memory for tpu_custom_call.1']
    #allocation7 [shape = 'u8[32768]{0}', space=vmem, size = 0x8000, scoped, tag = 'input window, operand 3, single buffered']
    #allocation8 [shape = 'u8[32768]{0}', space=vmem, size = 0x8000, scoped, tag = 'input window, operand 5, single buffered']
    #allocation9 [shape = 's32[1]{0}', space=sflag, size = 0x4, scoped, tag = 'scoped memory for tpu_custom_call.1']
    #allocation10 [shape = 'u8[2048]{0}', space=vmem, size = 0x800, scoped, tag = 'output window, operand 0, single buffered']
    #allocation11 [shape = 'u8[4096]{0}', space=vmem, size = 0x1000, scoped, tag = 'output window, operand 1, single buffered']
    #allocation12 [shape = 's32[1]{0}', space=sflag, size = 0x4, scoped, tag = 'scoped memory for tpu_custom_call.1']
    %14 = vsyncpa [#allocation3], 0
    %15 = vsyncpa [#allocation6], 0
    %16 = vsyncpa [#allocation9], 0
    %17 = vsyncpa [#allocation4], 0
    %18 = vsyncpa [#allocation12], 0
    // Predicated region
    $region2: #{tpu_custom_call.1} parent=1 // pred_check
      _
    $region3: #{tpu_custom_call.1} parent=1 // pred_check_branch
      %20 = sbr.rel (0) target = $region5
    $region4: #{tpu_custom_call.1} parent=1 // pred_region
      %s22 = ssub.s32 128, 128
      %23 = vsyncadd [#allocation3], %s22
      %s25 = sshll.u32 [#allocation2], 4
      %s26 = int_to_ptr.vmem [resolvable:$true] %s25
      %28 = dma.hbm_to_vmem [thread:$0]  %s0, 128, %s26, [#allocation3]
    $region5: #{tpu_custom_call.1} parent=1 // pred_fallthru
      _
    // Predicated region
    $region6: #{tpu_custom_call.1} parent=1 // pred_check
      _
    $region7: #{tpu_custom_call.1} parent=1 // pred_check_branch
      %30 = sbr.rel (0) target = $region9
    $region8: #{tpu_custom_call.1} parent=1 // pred_region
      %s32 = ssub.s32 128, 128
      %33 = vsyncadd [#allocation6], %s32
      %s34 = sshll.u32 [#allocation5], 4
      %s35 = int_to_ptr.vmem [resolvable:$true] %s34
      %40 = dma.hbm_to_vmem [thread:$0]  %s1, 128, %s35, [#allocation6], 64, 64, 4
    $region9: #{tpu_custom_call.1} parent=1 // pred_fallthru
      _
    // Predicated region
    $region10: #{tpu_custom_call.1} parent=1 // pred_check
      _
    $region11: #{tpu_custom_call.1} parent=1 // pred_check_branch
      %42 = sbr.rel (0) target = $region13
    $region12: #{tpu_custom_call.1} parent=1 // pred_region
      _
    $region13: #{tpu_custom_call.1} parent=1 // pred_fallthru
      _
    // Predicated region
    $region14: #{tpu_custom_call.1} parent=1 // pred_check
      _
    $region15: #{tpu_custom_call.1} parent=1 // pred_check_branch
      %44 = sbr.rel (0) target = $region17
    $region16: #{tpu_custom_call.1} parent=1 // pred_region
      %s46 = ssub.s32 1024, 1024
      %47 = vsyncadd [#allocation6], %s46
      %s48 = sshll.u32 [#allocation7], 4
      %s49 = int_to_ptr.vmem [resolvable:$true] %s48
      %54 = dma.hbm_to_vmem [thread:$0]  %s3, 1024, %s49, [#allocation6], 64, 64, 4
    $region17: #{tpu_custom_call.1} parent=1 // pred_fallthru
      _
    // Predicated region
    $region18: #{tpu_custom_call.1} parent=1 // pred_check
      _
    $region19: #{tpu_custom_call.1} parent=1 // pred_check_branch
      %56 = sbr.rel (0) target = $region21
    $region20: #{tpu_custom_call.1} parent=1 // pred_region
      _
    $region21: #{tpu_custom_call.1} parent=1 // pred_fallthru
      _
    // Predicated region
    $region22: #{tpu_custom_call.1} parent=1 // pred_check
      _
    $region23: #{tpu_custom_call.1} parent=1 // pred_check_branch
      %58 = sbr.rel (0) target = $region25
    $region24: #{tpu_custom_call.1} parent=1 // pred_region
      %s60 = ssub.s32 1024, 1024
      %61 = vsyncadd [#allocation9], %s60
      %s62 = sshll.u32 [#allocation8], 4
      %s63 = int_to_ptr.vmem [resolvable:$true] %s62
      %68 = dma.hbm_to_vmem [thread:$0]  %s5, 1024, %s63, [#allocation9], 64, 64, 4
    $region25: #{tpu_custom_call.1} parent=1 // pred_fallthru
      _
    // Predicated region
    $region26: #{tpu_custom_call.1} parent=1 // pred_check
      _
    $region27: #{tpu_custom_call.1} parent=1 // pred_check_branch
      %70 = sbr.rel (0) target = $region29
    $region28: #{tpu_custom_call.1} parent=1 // pred_region
      _
    $region29: #{tpu_custom_call.1} parent=1 // pred_fallthru
      _
    // Predicated region
    $region30: #{tpu_custom_call.1} parent=1 // pred_check
      _
    $region31: #{tpu_custom_call.1} parent=1 // pred_check_branch
      %72 = sbr.rel (0) target = $region33
    $region32: #{tpu_custom_call.1} parent=1 // pred_region
      %73 = dma.done [#allocation3], 128
    $region33: #{tpu_custom_call.1} parent=1 // pred_fallthru
      _
    // Predicated region
    $region34: #{tpu_custom_call.1} parent=1 // pred_check
      _
    $region35: #{tpu_custom_call.1} parent=1 // pred_check_branch
      %75 = sbr.rel (0) target = $region37
    $region36: #{tpu_custom_call.1} parent=1 // pred_region
      %76 = dma.done [#allocation6], 128
    $region37: #{tpu_custom_call.1} parent=1 // pred_fallthru
      _
    // Predicated region
    $region38: #{tpu_custom_call.1} parent=1 // pred_check
      _
    $region39: #{tpu_custom_call.1} parent=1 // pred_check_branch
      %78 = sbr.rel (0) target = $region41
    $region40: #{tpu_custom_call.1} parent=1 // pred_region
      %79 = dma.done [#allocation6], 1024
    $region41: #{tpu_custom_call.1} parent=1 // pred_fallthru
      _
    // Predicated region
    $region42: #{tpu_custom_call.1} parent=1 // pred_check
      _
    $region43: #{tpu_custom_call.1} parent=1 // pred_check_branch
      %81 = sbr.rel (0) target = $region45
    $region44: #{tpu_custom_call.1} parent=1 // pred_region
      %82 = dma.done [#allocation9], 1024
    $region45: #{tpu_custom_call.1} parent=1 // pred_fallthru
      _
    %v84 = vld [vmem:[#allocation2] sm:$0xff]
    %v85 = vpack.c.bf16 %v84, %v84
    %v86 = vld [vmem:[#allocation5] sm:$0xf]
    %v87 = vld [vmem:[#allocation5 + $0x4] sm:$0xf]
    %v88 = vld [vmem:[%s2] sm:$0x1]
    %v90 = vlaneseq
    %v91 = vshrl.u32 %v90, 7
    %v92 = vsub.s32 0, %v91
    %v93 = vrot.slane %v88, %v92
    %v97 = vunpack.c.l.b16 %v86
    %v98 = vunpack.c.l.b16 %v87
    %v99 = vpack.c.b16 %v98, %v97
    %vm101 = vcmask 130048
    %v103 = vsel %vm101, %v85, 0
    %105 = vmatprep.subr.bf16.mxu0 0
    %106 = vmatpush1.bf16.msra.mxu0 0
    %107 = vmatprep.subr.bf16.mxu0 0
    %108 = vmatpush1.bf16.msra.mxu0 0
    %109 = vmatprep.subr.bf16.mxu0 0
    %110 = vmatpush1.bf16.msra.mxu0 0
    %111 = vmatprep.subr.bf16.mxu0 0
    %112 = vmatpush1.bf16.msra.mxu0 0
    %113 = vmatprep.subr.bf16.mxu0 0
    %114 = vmatpush1.bf16.msra.mxu0 0
    %115 = vmatprep.subr.bf16.mxu0 0
    %116 = vmatpush1.bf16.msra.mxu0 0
    %117 = vmatprep.subr.bf16.mxu0 0
    %118 = vmatpush1.bf16.msra.mxu0 0
    %119 = vmatprep.subr.bf16.mxu0 0
    %120 = vmatpush1.bf16.msra.mxu0 %v99
    %121 = vmatprep.subr.bf16.mxu0 0
    %122 = vmatpush2.bf16.msra.mxu0 0
    %123 = vmatprep.subr.bf16.mxu0 0
    %124 = vmatpush2.bf16.msra.mxu0 0
    %125 = vmatprep.subr.bf16.mxu0 0
    %126 = vmatpush2.bf16.msra.mxu0 0
    %127 = vmatprep.subr.bf16.mxu0 0
    %128 = vmatpush2.bf16.msra.mxu0 0
    %129 = vmatprep.subr.bf16.mxu0 0
    %130 = vmatpush2.bf16.msra.mxu0 0
    %131 = vmatprep.subr.bf16.mxu0 0
    %132 = vmatpush2.bf16.msra.mxu0 0
    %133 = vmatprep.subr.bf16.mxu0 0
    %134 = vmatpush2.bf16.msra.mxu0 0
    %135 = vmatprep.subr.bf16.mxu0 0
    %136 = vmatpush2.bf16.msra.mxu0 0
    %137 = vmatprep.mubr.bf16.mxu0 0
    %138 = vmatmul.mubr.bf16.gmra.mxu0 %v103
    %v139 = vpop.f32.mrf.mxu0
    %v140 = vadd.f32 %v93, %v139
    %v141 = vpop.f32.mrf.mxu0
    %v142 = vpop.f32.mrf.mxu0
    %v143 = vpop.f32.mrf.mxu0
    %144 = vdwg.mxu0
    %v145 = vmax.f32 %v140, 0.0
    %v146 = vpack.c.bf16 %v145, %v145
    %v147 = vld [vmem:[#allocation7] sm:$0xf]
    %v148 = vld [vmem:[#allocation7 + $0x4] sm:$0xf]
    %v149 = vld [vmem:[#allocation7 + $0x8] sm:$0xf]
    %v150 = vld [vmem:[#allocation7 + $0xc] sm:$0xf]
    %v151 = vld [vmem:[#allocation7 + $0x10] sm:$0xf]
    %v152 = vld [vmem:[#allocation7 + $0x14] sm:$0xf]
    %v153 = vld [vmem:[#allocation7 + $0x18] sm:$0xf]
    %v154 = vld [vmem:[#allocation7 + $0x1c] sm:$0xf]
    %v155 = vld [vmem:[#allocation7 + $0x20] sm:$0xf]
    %v156 = vld [vmem:[#allocation7 + $0x24] sm:$0xf]
    %v157 = vld [vmem:[#allocation7 + $0x28] sm:$0xf]
    %v158 = vld [vmem:[#allocation7 + $0x2c] sm:$0xf]
    %v159 = vld [vmem:[#allocation7 + $0x30] sm:$0xf]
    %v160 = vld [vmem:[#allocation7 + $0x34] sm:$0xf]
    %v161 = vld [vmem:[#allocation7 + $0x38] sm:$0xf]
    %v162 = vld [vmem:[#allocation7 + $0x3c] sm:$0xf]
    %v163 = vld [vmem:[%s4] sm:$0x1]
    %v165 = vlaneseq
    %v166 = vshrl.u32 %v165, 7
    %v167 = vsub.s32 0, %v166
    %v168 = vrot.slane %v163, %v167
    %v186 = vunpack.c.l.b16 %v147
    %v187 = vunpack.c.l.b16 %v148
    %v188 = vunpack.c.l.b16 %v149
    %v189 = vunpack.c.l.b16 %v150
    %v190 = vunpack.c.l.b16 %v151
    %v191 = vunpack.c.l.b16 %v152
    %v192 = vunpack.c.l.b16 %v153
    %v193 = vunpack.c.l.b16 %v154
    %v194 = vunpack.c.l.b16 %v155
    %v195 = vunpack.c.l.b16 %v156
    %v196 = vunpack.c.l.b16 %v157
    %v197 = vunpack.c.l.b16 %v158
    %v198 = vunpack.c.l.b16 %v159
    %v199 = vunpack.c.l.b16 %v160
    %v200 = vunpack.c.l.b16 %v161
    %v201 = vunpack.c.l.b16 %v162
    %v202 = vpack.c.b16 %v187, %v186
    %v203 = vpack.c.b16 %v189, %v188
    %v204 = vpack.c.b16 %v191, %v190
    %v205 = vpack.c.b16 %v193, %v192
    %v206 = vpack.c.b16 %v195, %v194
    %v207 = vpack.c.b16 %v197, %v196
    %v208 = vpack.c.b16 %v199, %v198
    %v209 = vpack.c.b16 %v201, %v200
    %218 = vmatprep.subr.bf16.mxu0 0
    %219 = vmatpush1.bf16.msra.mxu0 %v209
    %220 = vmatprep.subr.bf16.mxu0 0
    %221 = vmatpush1.bf16.msra.mxu0 %v208
    %222 = vmatprep.subr.bf16.mxu0 0
    %223 = vmatpush1.bf16.msra.mxu0 %v207
    %224 = vmatprep.subr.bf16.mxu0 0
    %225 = vmatpush1.bf16.msra.mxu0 %v206
    %226 = vmatprep.subr.bf16.mxu0 0
    %227 = vmatpush1.bf16.msra.mxu0 %v205
    %228 = vmatprep.subr.bf16.mxu0 0
    %229 = vmatpush1.bf16.msra.mxu0 %v204
    %230 = vmatprep.subr.bf16.mxu0 0
    %231 = vmatpush1.bf16.msra.mxu0 %v203
    %232 = vmatprep.subr.bf16.mxu0 0
    %233 = vmatpush1.bf16.msra.mxu0 %v202
    %234 = vmatprep.subr.bf16.mxu0 0
    %235 = vmatpush2.bf16.msra.mxu0 0
    %236 = vmatprep.subr.bf16.mxu0 0
    %237 = vmatpush2.bf16.msra.mxu0 0
    %238 = vmatprep.subr.bf16.mxu0 0
    %239 = vmatpush2.bf16.msra.mxu0 0
    %240 = vmatprep.subr.bf16.mxu0 0
    %241 = vmatpush2.bf16.msra.mxu0 0
    %242 = vmatprep.subr.bf16.mxu0 0
    %243 = vmatpush2.bf16.msra.mxu0 0
    %244 = vmatprep.subr.bf16.mxu0 0
    %245 = vmatpush2.bf16.msra.mxu0 0
    %246 = vmatprep.subr.bf16.mxu0 0
    %247 = vmatpush2.bf16.msra.mxu0 0
    %248 = vmatprep.subr.bf16.mxu0 0
    %249 = vmatpush2.bf16.msra.mxu0 0
    %250 = vmatprep.mubr.bf16.mxu0 0
    %251 = vmatmul.mubr.bf16.gmra.mxu0 %v146
    %v252 = vpop.f32.mrf.mxu0
    %v253 = vadd.f32 %v168, %v252
    %v254 = vpop.f32.mrf.mxu0
    %v255 = vpop.f32.mrf.mxu0
    %v256 = vpop.f32.mrf.mxu0
    %257 = vdwg.mxu0
    %v258 = vmax.f32 %v253, 0.0
    %v259 = vpack.c.bf16 %v258, %v258
    %260 = vst [vmem:[#allocation10] sm:$0xf] %v259
    %v261 = vld [vmem:[#allocation8] sm:$0xf]
    %v262 = vld [vmem:[#allocation8 + $0x4] sm:$0xf]
    %v263 = vld [vmem:[#allocation8 + $0x8] sm:$0xf]
    %v264 = vld [vmem:[#allocation8 + $0xc] sm:$0xf]
    %v265 = vld [vmem:[#allocation8 + $0x10] sm:$0xf]
    %v266 = vld [vmem:[#allocation8 + $0x14] sm:$0xf]
    %v267 = vld [vmem:[#allocation8 + $0x18] sm:$0xf]
    %v268 = vld [vmem:[#allocation8 + $0x1c] sm:$0xf]
    %v269 = vld [vmem:[#allocation8 + $0x20] sm:$0xf]
    %v270 = vld [vmem:[#allocation8 + $0x24] sm:$0xf]
    %v271 = vld [vmem:[#allocation8 + $0x28] sm:$0xf]
    %v272 = vld [vmem:[#allocation8 + $0x2c] sm:$0xf]
    %v273 = vld [vmem:[#allocation8 + $0x30] sm:$0xf]
    %v274 = vld [vmem:[#allocation8 + $0x34] sm:$0xf]
    %v275 = vld [vmem:[#allocation8 + $0x38] sm:$0xf]
    %v276 = vld [vmem:[#allocation8 + $0x3c] sm:$0xf]
    %v277 = vld [vmem:[%s6] sm:$0x1]
    %v279 = vlaneseq
    %v280 = vshrl.u32 %v279, 7
    %v281 = vsub.s32 0, %v280
    %v282 = vrot.slane %v277, %v281
    %v300 = vunpack.c.l.b16 %v261
    %v301 = vunpack.c.l.b16 %v262
    %v302 = vunpack.c.l.b16 %v263
    %v303 = vunpack.c.l.b16 %v264
    %v304 = vunpack.c.l.b16 %v265
    %v305 = vunpack.c.l.b16 %v266
    %v306 = vunpack.c.l.b16 %v267
    %v307 = vunpack.c.l.b16 %v268
    %v308 = vunpack.c.l.b16 %v269
    %v309 = vunpack.c.l.b16 %v270
    %v310 = vunpack.c.l.b16 %v271
    %v311 = vunpack.c.l.b16 %v272
    %v312 = vunpack.c.l.b16 %v273
    %v313 = vunpack.c.l.b16 %v274
    %v314 = vunpack.c.l.b16 %v275
    %v315 = vunpack.c.l.b16 %v276
    %v316 = vpack.c.b16 %v301, %v300
    %v317 = vpack.c.b16 %v303, %v302
    %v318 = vpack.c.b16 %v305, %v304
    %v319 = vpack.c.b16 %v307, %v306
    %v320 = vpack.c.b16 %v309, %v308
    %v321 = vpack.c.b16 %v311, %v310
    %v322 = vpack.c.b16 %v313, %v312
    %v323 = vpack.c.b16 %v315, %v314
    %332 = vmatprep.subr.bf16.mxu0 0
    %333 = vmatpush1.bf16.msra.mxu0 %v323
    %334 = vmatprep.subr.bf16.mxu0 0
    %335 = vmatpush1.bf16.msra.mxu0 %v322
    %336 = vmatprep.subr.bf16.mxu0 0
    %337 = vmatpush1.bf16.msra.mxu0 %v321
    %338 = vmatprep.subr.bf16.mxu0 0
    %339 = vmatpush1.bf16.msra.mxu0 %v320
    %340 = vmatprep.subr.bf16.mxu0 0
    %341 = vmatpush1.bf16.msra.mxu0 %v319
    %342 = vmatprep.subr.bf16.mxu0 0
    %343 = vmatpush1.bf16.msra.mxu0 %v318
    %344 = vmatprep.subr.bf16.mxu0 0
    %345 = vmatpush1.bf16.msra.mxu0 %v317
    %346 = vmatprep.subr.bf16.mxu0 0
    %347 = vmatpush1.bf16.msra.mxu0 %v316
    %348 = vmatprep.subr.bf16.mxu0 0
    %349 = vmatpush2.bf16.msra.mxu0 0
    %350 = vmatprep.subr.bf16.mxu0 0
    %351 = vmatpush2.bf16.msra.mxu0 0
    %352 = vmatprep.subr.bf16.mxu0 0
    %353 = vmatpush2.bf16.msra.mxu0 0
    %354 = vmatprep.subr.bf16.mxu0 0
    %355 = vmatpush2.bf16.msra.mxu0 0
    %356 = vmatprep.subr.bf16.mxu0 0
    %357 = vmatpush2.bf16.msra.mxu0 0
    %358 = vmatprep.subr.bf16.mxu0 0
    %359 = vmatpush2.bf16.msra.mxu0 0
    %360 = vmatprep.subr.bf16.mxu0 0
    %361 = vmatpush2.bf16.msra.mxu0 0
    %362 = vmatprep.subr.bf16.mxu0 0
    %363 = vmatpush2.bf16.msra.mxu0 0
    %364 = vmatprep.mubr.bf16.mxu0 0
    %365 = vmatmul.mubr.bf16.gmra.mxu0 %v259
    %v366 = vpop.f32.mrf.mxu0
    %v367 = vadd.f32 %v282, %v366
    %v368 = vpop.f32.mrf.mxu0
    %v369 = vpop.f32.mrf.mxu0
    %v370 = vpop.f32.mrf.mxu0
    %371 = vdwg.mxu0
    %372 = vst [vmem:[#allocation11] sm:$0xff] %v367
    // Predicated region
    $region46: #{tpu_custom_call.1} parent=1 // pred_check
      _
    $region47: #{tpu_custom_call.1} parent=1 // pred_check_branch
      %374 = sbr.rel (0) target = $region49
    $region48: #{tpu_custom_call.1} parent=1 // pred_region
      %s376 = ssub.s32 64, 64
      %377 = vsyncadd [#allocation4], %s376
      %s379 = sshll.u32 [#allocation10], 4
      %s380 = int_to_ptr.vmem [resolvable:$true] %s379
      %382 = dma.vmem_to_hbm [thread:$0]  %s380, 64, %s7, [#allocation4]
    $region49: #{tpu_custom_call.1} parent=1 // pred_fallthru
      _
    // Predicated region
    $region50: #{tpu_custom_call.1} parent=1 // pred_check
      _
    $region51: #{tpu_custom_call.1} parent=1 // pred_check_branch
      %384 = sbr.rel (0) target = $region53
    $region52: #{tpu_custom_call.1} parent=1 // pred_region
      %s386 = ssub.s32 128, 128
      %387 = vsyncadd [#allocation12], %s386
      %s389 = sshll.u32 [#allocation11], 4
      %s390 = int_to_ptr.vmem [resolvable:$true] %s389
      %392 = dma.vmem_to_hbm [thread:$0]  %s390, 128, %s8, [#allocation12]
    $region53: #{tpu_custom_call.1} parent=1 // pred_fallthru
      _
    // Predicated region
    $region54: #{tpu_custom_call.1} parent=1 // pred_check
      _
    $region55: #{tpu_custom_call.1} parent=1 // pred_check_branch
      %394 = sbr.rel (0) target = $region57
    $region56: #{tpu_custom_call.1} parent=1 // pred_region
      %395 = dma.done [#allocation4], 64
    $region57: #{tpu_custom_call.1} parent=1 // pred_fallthru
      _
    // Predicated region
    $region58: #{tpu_custom_call.1} parent=1 // pred_check
      _
    $region59: #{tpu_custom_call.1} parent=1 // pred_check_branch
      %397 = sbr.rel (0) target = $region61
    $region60: #{tpu_custom_call.1} parent=1 // pred_region
      %398 = dma.done [#allocation12], 128
    $region61: #{tpu_custom_call.1} parent=1 // pred_fallthru
      _
    %399 = vsyncpa [#allocation3], 1
    %400 = vsyncpa [#allocation6], 1
    %401 = vsyncpa [#allocation9], 1
    %402 = vsyncpa [#allocation4], 1
    %403 = vsyncpa [#allocation12], 1

</llo_original>
